<compile_context>
chip_gen: v7x
topology: tpu7x:2x2x1
jax: 0.10.0
libtpu: 0.0.40
codegen_flags: <defaults>
</compile_context>

<pallas_src>
import math

import jax
import jax.numpy as jnp
from jax.experimental import pallas as pl
from jax.experimental.pallas import tpu as pltpu


def _cdiv(a, b):
    return -(-a // b)


# ---------------------------------------------------------------------------
# Kernels.  scale_ref: (B,) f32 in SMEM (scalar prefetch) = mask_b / keep_prob.
# ---------------------------------------------------------------------------
def _drop_path_kernel(scale_ref, x_ref, o_ref):
    b = pl.program_id(0)
    s = scale_ref[b].astype(o_ref.dtype)       # multiply in the output dtype
    o_ref[...] = x_ref[...] * s


def _drop_path_add_kernel(scale_ref, x_ref, res_ref, o_ref):
    # Fused residual add: saves a full HBM round trip of the activation.
    b = pl.program_id(0)
    s = scale_ref[b].astype(o_ref.dtype)
    o_ref[...] = res_ref[...] + x_ref[...] * s


# ---------------------------------------------------------------------------
# Tiling policy.
# ---------------------------------------------------------------------------
def _per_block_budget_bytes(n_arrays):
    """Per-block byte budget so n_arrays x 2 double-buffers stay under each
    generation's scoped-VMEM default (v5e 16 MiB; v6e 32 MiB; v7x 32 MiB
    scoped / 64 MiB physical)."""
    kind = ""
    try:
        kind = jax.devices()[0].device_kind.lower()
    except Exception:
        pass
    if "v5" in kind:
        scoped = 14 * 1024 * 1024
    elif "v7" in kind:
        scoped = 24 * 1024 * 1024
    else:  # v6e and unknown chips
        scoped = 28 * 1024 * 1024
    return max(512 * 1024, scoped // (2 * n_arrays))


def _pick_lane(per_sample, last_dim):
    """Lane (last) dim of the kernel view.  Prefer a large multiple of 128
    that divides the per-sample element count (lane-dense stores); otherwise
    keep the original channel dim as a full-extent last block dim."""
    if per_sample % 128 == 0:
        for cand in (2048, 1024, 512, 256, 128):
            if per_sample % cand == 0:
                return cand
    return max(1, last_dim)


def _pick_row_tile(rows, lane, itemsize, budget_bytes, batch):
    """Dtype-aware sublane-aligned row tile, bounded by the VMEM budget, with
    enough grid steps (>= 4) to occupy both v7x TensorCores.  Never returns an
    unbounded full-row block; ragged last blocks come from a cdiv grid."""
    sub = max(8, 32 // max(1, itemsize))        # 8 (f32) / 16 (bf16) / 32 (i8)
    if rows <= sub:
        return rows                              # block spans full row extent
    max_rows = max(1, budget_bytes // max(1, lane * itemsize))
    tr = max(sub, (min(rows, max_rows) // sub) * sub)
    while batch * _cdiv(rows, tr) < 4 and tr > sub:
        tr = max(sub, ((tr // 2) // sub) * sub)
    return tr


# ---------------------------------------------------------------------------
# Wrappers.
# ---------------------------------------------------------------------------
def pallas_drop_path_apply(x, scale, residual=None, donate_x=False):
    """out[b] = x[b] * scale[b]  (+ residual[b] if given).

    x: (B, ...) array.  scale: (B,) float32 per-sample scale.
    """
    orig_shape = x.shape
    B = orig_shape[0]
    per_sample = int(math.prod(orig_shape[1:])) if x.ndim > 1 else 1
    lane = _pick_lane(per_sample, orig_shape[-1] if x.ndim >= 2 else 1)
    rows = max(1, per_sample // lane)

    x3 = x.reshape(B, rows, lane)
    operands = [x3]
    kernel = _drop_path_kernel
    if residual is not None:
        operands.append(residual.reshape(B, rows, lane))
        kernel = _drop_path_add_kernel

    n_arrays = len(operands) + 1                      # inputs + output
    budget = _per_block_budget_bytes(n_arrays)
    tr = _pick_row_tile(rows, lane, x3.dtype.itemsize, budget, B)
    grid = (B, _cdiv(rows, tr))

    blk = pl.BlockSpec((1, tr, lane), lambda b, r, s_ref: (b, r, 0))
    bytes_accessed = n_arrays * x3.size * x3.dtype.itemsize
    flops = x3.size * (2 if residual is not None else 1)

    out = pl.pallas_call(
        kernel,
        out_shape=jax.ShapeDtypeStruct(x3.shape, x3.dtype),
        grid_spec=pltpu.PrefetchScalarGridSpec(
            num_scalar_prefetch=1,                    # scale -> SMEM
            grid=grid,
            in_specs=[blk] * len(operands),
            out_specs=blk,
        ),
        compiler_params=pltpu.CompilerParams(
            dimension_semantics=("parallel", "parallel"),
        ),
        cost_estimate=pl.CostEstimate(
            flops=flops, transcendentals=0, bytes_accessed=bytes_accessed),
        input_output_aliases={1: 0} if donate_x else {},
    )(scale.astype(jnp.float32), *operands)
    return out.reshape(orig_shape)


def drop_path(x, key, drop_prob=0.0, training=False, residual=None):
    """JAX/Pallas equivalent of the PyTorch `drop_path` / DropPath.forward.

    If `residual` is given, returns residual + drop_path(x) fused in one pass.
    """
    if drop_prob is None or drop_prob == 0.0 or not training:
        return x if residual is None else x + residual
    keep_prob = 1.0 - drop_prob
    # Same construction as the reference: floor(keep_prob + U[0,1)) in {0, 1}.
    # O(B) scalar work in the wrapper; the bandwidth-bound scaling of x is the
    # Pallas kernel.
    u = jax.random.uniform(key, (x.shape[0],), dtype=jnp.float32)
    keep_mask = jnp.floor(keep_prob + u)
    scale = keep_mask / keep_prob                      # (B,) f32: 0 or 1/kp
    return pallas_drop_path_apply(x, scale, residual=residual)


if __name__ == "__main__":
    # DropPath sits on the residual path of a ViT block -> x is (B, N, C).
    B, N, C = 2, 8, 32
    drop_prob = 0.25
    keep_prob = 1.0 - drop_prob

    key = jax.random.PRNGKey(0)
    kx, kmask, kres = jax.random.split(key, 3)
    x = jax.random.normal(kx, (B, N, C), dtype=jnp.float32)

    # Reference mask / scale (identical construction to the wrapper).
    u = jax.random.uniform(kmask, (B,), dtype=jnp.float32)
    keep_mask = jnp.floor(keep_prob + u)
    scale = keep_mask / keep_prob

    # 1) Training path (runs the Pallas kernel).
    out = drop_path(x, kmask, drop_prob=drop_prob, training=True)
    out = jax.block_until_ready(out)
    ref = x * scale[:, None, None]
    assert out.shape == x.shape
    assert jnp.allclose(out, ref, atol=1e-6, rtol=1e-6)

    # 2) Fused residual path (one HBM pass instead of two).
    res = jax.random.normal(kres, (B, N, C), dtype=jnp.float32)
    out_fused = drop_path(x, kmask, drop_prob=drop_prob, training=True,
                          residual=res)
    out_fused = jax.block_until_ready(out_fused)
    assert jnp.allclose(out_fused, res + ref, atol=1e-6, rtol=1e-6)

    # 3) bf16 activations (ViT-Tiny-ish channels; exercises the lane-dense
    #    re-flatten and dtype-aware sublane tiling).
    xb = jax.random.normal(kx, (B, N, 192), dtype=jnp.bfloat16)
    out_bf = drop_path(xb, kmask, drop_prob=drop_prob, training=True)
    out_bf = jax.block_until_ready(out_bf)
    ref_bf = xb * scale.astype(jnp.bfloat16)[:, None, None]
    assert jnp.allclose(out_bf.astype(jnp.float32),
                        ref_bf.astype(jnp.float32), atol=1e-2, rtol=1e-2)

    # 4) Eval path is the identity (matches the PyTorch module in .eval()).
    out_eval = drop_path(x, kmask, drop_prob=drop_prob, training=False)
    assert jnp.allclose(out_eval, x)

    print("KERNEL_OK")
</pallas_src>

<mosaic_0001>
module attributes {stable_mosaic.version = 11 : i64} {
  func.func @_drop_path_kernel(%arg0: i32, %arg1: i32, %arg2: memref<2xf32, #tpu.memory_space<smem>>, %arg3: memref<1x1x256xf32, #tpu.memory_space<vmem>>, %arg4: memref<1x1x256xf32, #tpu.memory_space<vmem>>) attributes {dimension_semantics = [#tpu.dimension_semantics<parallel>, #tpu.dimension_semantics<parallel>], iteration_bounds = array<i64: 2, 1>, scalar_prefetch = 1 : i64, scratch_operands = 0 : i64, tpu.core_type = #tpu.core_type<tc>, window_params = [{transform_indices = @transform_0, window_bounds = array<i64: 1, 1, 256>}, {transform_indices = @transform_1, window_bounds = array<i64: 1, 1, 256>}]} {
    %0 = arith.index_cast %arg0 : i32 to index
    %1 = memref.load %arg2[%0] : memref<2xf32, #tpu.memory_space<smem>>
    %c0 = arith.constant 0 : index
    %c0_0 = arith.constant 0 : index
    %c0_1 = arith.constant 0 : index
    %2 = vector.load %arg3[%c0, %c0_0, %c0_1] : memref<1x1x256xf32, #tpu.memory_space<vmem>>, vector<1x1x256xf32>
    %3 = vector.broadcast %1 : f32 to vector<1x1x256xf32>
    %4 = arith.mulf %2, %3 : vector<1x1x256xf32>
    %c0_2 = arith.constant 0 : index
    %c0_3 = arith.constant 0 : index
    %c0_4 = arith.constant 0 : index
    %5 = vector.load %arg4[%c0_2, %c0_3, %c0_4] : memref<1x1x256xf32, #tpu.memory_space<vmem>>, vector<1x1x256xf32>
    tpu.vector_store %arg4[%c0_2, %c0_3, %c0_4], %4 {strides = array<i32>} : memref<1x1x256xf32, #tpu.memory_space<vmem>>, vector<1x1x256xf32>,
    return
  }
  func.func @transform_0(%arg0: i32, %arg1: i32, %arg2: memref<2xf32, #tpu.memory_space<smem>>) -> (i32, i32, i32) {
    %c0_i32 = arith.constant 0 : i32
    %c0_i32_0 = arith.constant 0 : i32
    return %arg0, %arg1, %c0_i32 : i32, i32, i32
  }
  func.func @transform_1(%arg0: i32, %arg1: i32, %arg2: memref<2xf32, #tpu.memory_space<smem>>) -> (i32, i32, i32) {
    %c0_i32 = arith.constant 0 : i32
    %c0_i32_0 = arith.constant 0 : i32
    return %arg0, %arg1, %c0_i32 : i32, i32, i32
  }
}

</mosaic_0001>

<llo_original>
// kernel: tpu_custom_call.1
$region0: #{tpu_custom_call.1}
  #allocation0 [shape = 'u32[]', space=smem, size = 0x4, offset = 0x4, fixed_abs, tag = 'smem constant byte address 0x4 - core index']
  #allocation1 [shape = 'u32[144,128]{1,0:T(1,128)}', space=vmem, size = 0x12000, scoped, tag = 'internal scratch']
  #allocation2 [shape = 's32[1]{0}', space=sflag, size = 0x4, scoped, tag = 'scoped memory for tpu_custom_call.1']
  #allocation3 [shape = 'u8[512]{0}', space=smem, size = 0x200, scoped, tag = 'prefetched SMEM operand 0']
  %s0 = inlined_call_operand.hbm [shape: f32[2], index: 0, kind: input, shape index: {}]
  %s1 = inlined_call_operand.hbm [shape: f32[2,1,256], index: 1, kind: input, shape index: {}]
  %s2 = inlined_call_operand.hbm [shape: f32[2,1,256], index: 2, kind: output, shape index: {}]
  %s3 = sld [smem:[#allocation0]]
  $region41: #{tpu_custom_call.1} parent=0
    _
  %s5 = ssub.s32 1, %s3
  %s6 = scalar_select 0, %s5, %s3
  %8 = dma.hbm_to_smem %s0, 16, [#allocation3], [#allocation2]
  %9 = dma.done [#allocation2], 16
  %10 = sfence
  $region1: #{tpu_custom_call.1} parent=0
    #allocation4 [shape = 'u8[2048]{0}', space=vmem, size = 0x800, scoped, tag = 'input window, operand 1']
    #allocation5 [shape = 's32[2]{0}', space=sflag, size = 0x8, scoped, tag = 'scoped memory for tpu_custom_call.1']
    #allocation6 [shape = 's32[2]{0}', space=sflag, size = 0x8, scoped, tag = 'scoped memory for tpu_custom_call.1']
    #allocation7 [shape = 'u8[2048]{0}', space=vmem, size = 0x800, scoped, tag = 'output window, operand 0']
    %11 = vsyncpa [#allocation5], 0
    %s12 = scalar_lea.sflag [#allocation5], 1
    %13 = vsyncpa %s12, 0
    %14 = vsyncpa [#allocation6], 0
    %s15 = scalar_lea.sflag [#allocation6], 1
    %16 = vsyncpa %s15, 0
    loop: start=0, step=1, limit=4
    $region2: #{tpu_custom_call.1} parent=1 // loop_pre_header
      _
    $region3: #{tpu_custom_call.1} parent=1 // loop_header
      %s18 = sphi 0, %s22
      %p19 = scmp.ge.s32.totalorder %s18, 4
      %s25 = sphi 0, %s37
      %s26 = sphi 0, %s33
      %s27 = sphi 0, %s25
      %s28 = sphi 0, %s26
      %s29 = sphi 0, %s27
      %s30 = sphi 0, %s28
      %s42 = sphi 0, %s44
      %s45 = sphi 0, %s42
      %s46 = sphi 0, %s45
      %s62 = sphi 0, %s46
      %s70 = sphi 0, %s72
      %s73 = sphi 0, %s70
      %s74 = sphi 0, %s73
      %s90 = sphi 0, %s74
    $region4: #{tpu_custom_call.1} parent=1 // loop_header_branch
      %21 = sbr.rel (%p19) target = $region8
    $region5: #{tpu_custom_call.1} parent=1 // loop_body
      %s23 = ssub.s32 %s18, 1
      %s24 = ssub.s32 %s18, 2
      %s31 = sadd.s32 1, %s26
      %p32 = scmp.ge.s32.totalorder %s31, 1
      %s33 = scalar_select %p32, 0, %s31
      %s34 = sadd.s32 1, %s25
      %s35 = scalar_select %p32, %s34, %s25
      %p36 = scmp.ge.s32.totalorder %s35, 2
      %s37 = scalar_select %p36, 0, %s35
      %s38 = ssub.s32 %s25, %s37
      %s39 = ssub.s32 %s26, %s33
      %s40 = sor.u32 %s38, %s39
      %p41 = scmp.eq.s32.totalorder %s40, 0
      %s43 = sadd.s32 %s42, 1
      %s44 = scalar_select %p41, %s42, %s43
      %p47 = pneg %p41
      %p48 = scmp.eq.s32.totalorder %s18, 1
      %p49 = por %p47, %p48
      %p50 = scmp.ne.s32.totalorder %s42, %s45
      %p51 = scmp.eq.s32.totalorder %s18, 0
      %p52 = por %p50, %p51
      %p53 = scmp.ne.s32.totalorder %s42, %s45
      %p54 = scmp.eq.s32.totalorder %s23, 1
      %p55 = por %p53, %p54
      %p56 = scmp.ne.s32.totalorder %s45, %s46
      %p57 = scmp.eq.s32.totalorder %s23, 0
      %p58 = por %p56, %p57
      %p59 = scmp.ne.s32.totalorder %s45, %s46
      %p60 = scmp.eq.s32.totalorder %s24, 1
      %p61 = por %p59, %p60
      %p63 = scmp.ne.s32.totalorder %s46, %s62
      %p64 = scmp.eq.s32.totalorder %s24, 0
      %p65 = por %p63, %p64
      %s66 = ssub.s32 %s25, %s37
      %s67 = ssub.s32 %s26, %s33
      %s68 = sor.u32 %s66, %s67
      %p69 = scmp.eq.s32.totalorder %s68, 0
      %s71 = sadd.s32 %s70, 1
      %s72 = scalar_select %p69, %s70, %s71
      %p75 = pneg %p69
      %p76 = scmp.eq.s32.totalorder %s18, 1
      %p77 = por %p75, %p76
      %p78 = scmp.ne.s32.totalorder %s70, %s73
      %p79 = scmp.eq.s32.totalorder %s18, 0
      %p80 = por %p78, %p79
      %p81 = scmp.ne.s32.totalorder %s70, %s73
      %p82 = scmp.eq.s32.totalorder %s23, 1
      %p83 = por %p81, %p82
      %p84 = scmp.ne.s32.totalorder %s73, %s74
      %p85 = scmp.eq.s32.totalorder %s23, 0
      %p86 = por %p84, %p85
      %p87 = scmp.ne.s32.totalorder %s73, %s74
      %p88 = scmp.eq.s32.totalorder %s24, 1
      %p89 = por %p87, %p88
      %p91 = scmp.ne.s32.totalorder %s74, %s90
      %p92 = scmp.eq.s32.totalorder %s24, 0
      %p93 = por %p91, %p92
      %p94 = scmp.le.s32.totalorder 1, %s18
      %p95 = scmp.lt.s32.totalorder %s18, 3
      %p96 = pnand %p94, %p95
      %p97 = pneg %p96
      // Predicated region
      $region9: #{tpu_custom_call.1} parent=5 // pred_check
        _
      $region10: #{tpu_custom_call.1} parent=5 // pred_check_branch
        %99 = sbr.rel (%p96) target = $region12
      $region11: #{tpu_custom_call.1} parent=5 // pred_region
        %s100 = ssub.s32 %s18, 1
      $region12: #{tpu_custom_call.1} parent=5 // pred_fallthru
        _
      %p101 = scmp.lt.s32.totalorder %s18, 2
      // Predicated region
      $region13: #{tpu_custom_call.1} parent=5 // pred_check
        %p102 = pneg %p101
      $region14: #{tpu_custom_call.1} parent=5 // pred_check_branch
        %104 = sbr.rel (%p102) target = $region16
      $region15: #{tpu_custom_call.1} parent=5 // pred_region
        // Predicated region
        $region17: #{tpu_custom_call.1} parent=15 // pred_check
          %p105 = pneg %p52
        $region18: #{tpu_custom_call.1} parent=15 // pred_check_branch
          %107 = sbr.rel (%p105) target = $region20
        $region19: #{tpu_custom_call.1} parent=15 // pred_region
          %s108 = sand.u32 %s42, 1
          %s109 = scalar_lea.sflag [#allocation5], %s108
          %s110 = sand.u32 %s42, 1
          %s111 = smul.addr %s110, 2
          %s112 = scalar_lea.vmem [#allocation4], %s111
          %s114 = ssub.s32 32, 32
          %115 = vsyncadd %s109, %s114
          %s116 = smul.addr %s26, 2
          %s117 = smul.addr %s25, 2
          %s118 = sadd.s32 %s116, %s117
          %s119 = smul.addr %s118, 16
          %s120 = scalar_lea.hbm %s1, %s119
          %s122 = sshll.u32 %s112, 4
          %s123 = int_to_ptr.vmem [resolvable:$true] %s122
          %125 = dma.hbm_to_vmem [thread:$0]  %s120, 32, %s123, %s109
        $region20: #{tpu_custom_call.1} parent=15 // pred_fallthru
          _
      $region16: #{tpu_custom_call.1} parent=5 // pred_fallthru
        _
      %p126 = scmp.le.s32.totalorder 1, %s18
      %p127 = scmp.lt.s32.totalorder %s18, 3
      %p128 = pnand %p126, %p127
      %p129 = pneg %p128
      // Predicated region
      $region21: #{tpu_custom_call.1} parent=5 // pred_check
        _
      $region22: #{tpu_custom_call.1} parent=5 // pred_check_branch
        %131 = sbr.rel (%p128) target = $region24
      $region23: #{tpu_custom_call.1} parent=5 // pred_region
        %s132 = ssub.s32 %s18, 1
        %s133 = sand.u32 %s45, 1
        %s134 = scalar_lea.sflag [#allocation5], %s133
        %s135 = sand.u32 %s45, 1
        %s136 = smul.addr %s135, 2
        %s137 = scalar_lea.vmem [#allocation4], %s136
        // Predicated region
        $region25: #{tpu_custom_call.1} parent=23 // pred_check
          %p138 = pneg %p58
        $region26: #{tpu_custom_call.1} parent=23 // pred_check_branch
          %140 = sbr.rel (%p138) target = $region28
        $region27: #{tpu_custom_call.1} parent=23 // pred_region
          %141 = dma.done %s134, 32
        $region28: #{tpu_custom_call.1} parent=23 // pred_fallthru
          _
        %s142 = sand.u32 %s45, 1
        %s143 = scalar_lea.sflag [#allocation5], %s142
        %s144 = sand.u32 %s45, 1
        %s145 = smul.addr %s144, 2
        %s146 = scalar_lea.vmem [#allocation4], %s145
        %p147 = pneg %p58
        %p148 = pneg %p55
        %p149 = pneg %p86
        %p150 = pneg %p83
        %s151 = sand.u32 %s73, 1
        %s152 = scalar_lea.sflag [#allocation6], %s151
        %s153 = sand.u32 %s73, 1
        %s154 = smul.addr %s153, 2
        %s155 = scalar_lea.vmem [#allocation7], %s154
        %s156 = sld [smem:[#allocation3 + %s27]]
        %v157 = vld [vmem:[%s137] sm:$0x3]
        %v158 = vstv %s156
        %v159 = vmul.f32 %v157, %v158
        %v160 = vlaneseq
        %vm161 = vcmp.ge.s32.totalorder %v160, 0
        %vm162 = vcmp.lt.s32.totalorder %v160, 256
        %vm163 = vmand %vm161, %vm162
        %164 = vst.msk [vmem:[%s155] sm:$0x3] %vm163, %v159
        %s165 = sand.u32 %s73, 1
        %s166 = scalar_lea.sflag [#allocation6], %s165
        %s167 = sand.u32 %s73, 1
        %s168 = smul.addr %s167, 2
        %s169 = scalar_lea.vmem [#allocation7], %s168
        // Predicated region
        $region29: #{tpu_custom_call.1} parent=23 // pred_check
          %p170 = pneg %p83
        $region30: #{tpu_custom_call.1} parent=23 // pred_check_branch
          %172 = sbr.rel (%p170) target = $region32
        $region31: #{tpu_custom_call.1} parent=23 // pred_region
          %s174 = ssub.s32 32, 32
          %175 = vsyncadd %s166, %s174
          %s176 = smul.addr %s28, 2
          %s177 = smul.addr %s27, 2
          %s178 = sadd.s32 %s176, %s177
          %s179 = smul.addr %s178, 16
          %s180 = scalar_lea.hbm %s2, %s179
          %s182 = sshll.u32 %s169, 4
          %s183 = int_to_ptr.vmem [resolvable:$true] %s182
          %185 = dma.vmem_to_hbm [thread:$0]  %s183, 32, %s180, %s166
        $region32: #{tpu_custom_call.1} parent=23 // pred_fallthru
          _
      $region24: #{tpu_custom_call.1} parent=5 // pred_fallthru
        _
      %p186 = scmp.le.s32.totalorder 2, %s18
      // Predicated region
      $region33: #{tpu_custom_call.1} parent=5 // pred_check
        %p187 = pneg %p186
      $region34: #{tpu_custom_call.1} parent=5 // pred_check_branch
        %189 = sbr.rel (%p187) target = $region36
      $region35: #{tpu_custom_call.1} parent=5 // pred_region
        %s190 = ssub.s32 %s18, 2
        // Predicated region
        $region37: #{tpu_custom_call.1} parent=35 // pred_check
          %p191 = pneg %p89
        $region38: #{tpu_custom_call.1} parent=35 // pred_check_branch
          %193 = sbr.rel (%p191) target = $region40
        $region39: #{tpu_custom_call.1} parent=35 // pred_region
          %s194 = sand.u32 %s74, 1
          %s195 = scalar_lea.sflag [#allocation6], %s194
          %s196 = sand.u32 %s74, 1
          %s197 = smul.addr %s196, 2
          %s198 = scalar_lea.vmem [#allocation7], %s197
          %199 = dma.done %s195, 32
        $region40: #{tpu_custom_call.1} parent=35 // pred_fallthru
          _
      $region36: #{tpu_custom_call.1} parent=5 // pred_fallthru
        _
    $region6: #{tpu_custom_call.1} parent=1 // loop_footer
      %s22 = sadd.s32 1, %s18
    $region7: #{tpu_custom_call.1} parent=1 // loop_footer_branch
      %17 = sbr.rel target = $region3
    $region8: #{tpu_custom_call.1} parent=1 // loop_exit
      _
    %200 = vsyncpa [#allocation5], 1
    %s201 = scalar_lea.sflag [#allocation5], 1
    %202 = vsyncpa %s201, 1
    %203 = vsyncpa [#allocation6], 1
    %s204 = scalar_lea.sflag [#allocation6], 1
    %205 = vsyncpa %s204, 1

</llo_original>
